<compile_context>
chip_gen: v5e
topology: v5e:2x2
jax: 0.10.0
libtpu: 0.0.40
codegen_flags: <defaults>
</compile_context>

<pallas_src>
import inspect
from functools import partial

import jax
import jax.numpy as jnp
from jax.experimental import pallas as pl
from jax.experimental.pallas import tpu as pltpu

_LANE = 128      # vreg lane width (last dim)
_SUBLANE = 8     # vreg sublane width (second-to-last dim)


def _round_up(n, m):
    return ((n + m - 1) // m) * m


def _supports_pipeline_mode():
    if not hasattr(pl, "Buffered"):
        return False
    try:
        return "pipeline_mode" in inspect.signature(pl.BlockSpec).parameters
    except (TypeError, ValueError):
        return False


_HAS_PIPELINE_MODE = _supports_pipeline_mode()


def _resident_spec(shape):
    """BlockSpec for a grid-invariant operand (weights/biases): single-buffered."""
    index_map = lambda i: (0,) * len(shape)
    if _HAS_PIPELINE_MODE:
        return pl.BlockSpec(shape, index_map, pipeline_mode=pl.Buffered(1))
    # Older jax: default double-buffering (correct; 2x weight VMEM, accounted
    # for in the vmem_limit computation below via _HAS_PIPELINE_MODE).
    return pl.BlockSpec(shape, index_map)


def _encoder_kernel(x_ref, w1_ref, b1_ref, w2_ref, b2_ref, o_ref, *, mxu_dtype):
    # Fused 2-layer MLP on one batch tile:
    #   matmul (MXU, bf16 operands, f32 acc) -> bias + ReLU (VPU, f32)
    #   -> matmul (MXU) -> bias -> store.
    # Weights arrive pre-cast to mxu_dtype; only x and h are cast in-kernel.
    x = x_ref[...].astype(mxu_dtype)
    h = jnp.dot(x, w1_ref[...], preferred_element_type=jnp.float32)
    h = jnp.maximum(h + b1_ref[...], 0.0)
    y = jnp.dot(h.astype(mxu_dtype), w2_ref[...],
                preferred_element_type=jnp.float32)
    o_ref[...] = (y + b2_ref[...]).astype(o_ref.dtype)


def simclr_forward(x, params, *, tb=None, use_bf16_mxu=True):
    """Pallas SimCLR.forward(x) == Encoder(x).  x: (N, D) float32 -> (N, C).

    NOTE: bf16 MXU operands (f32 accumulation) deliberately deviate from the
    PyTorch f32 Linear numerics by ~1e-3 relative error (fine for SimCLR
    embeddings; set use_bf16_mxu=False for bit-closer f32 operands).
    """
    w1, b1, w2, b2 = params
    N, D = x.shape
    H = w1.shape[1]
    C = w2.shape[1]

    mxu_dtype = jnp.bfloat16 if use_bf16_mxu else jnp.float32
    f32 = jnp.float32

    # Pre-cast weights once in the wrapper; biases stay f32 for the VPU adds.
    x = x.astype(f32)
    w1m = w1.astype(mxu_dtype)
    w2m = w2.astype(mxu_dtype)
    b1f = b1.astype(f32).reshape(1, H)
    b2f = b2.astype(f32).reshape(1, C)

    # Batch-tile policy:
    #   * sublane-aligned (multiple of 8),
    #   * >= 2 grid steps for N >= 16 so the "parallel" axis shards across
    #     both v7x TensorCores,
    #   * capped at 512 rows (v6e mem-bound tiling sweet spot; don't shrink
    #     below 256 for large batches — 512 satisfies that).
    if tb is None:
        if N <= 2 * _SUBLANE:
            tb = _round_up(max(N, 1), _SUBLANE)
        else:
            tb = min(512, _round_up(-(-N // 2), _SUBLANE))
    tb = max(_SUBLANE, _round_up(tb, _SUBLANE))
    grid_steps = pl.cdiv(N, tb)

    # VMEM budget: double-buffered x/out tiles, resident weights (x1 if
    # single-buffered, x2 otherwise), plus in-kernel scratch (bf16 x copy,
    # f32 h, bf16 h copy, f32 y) and >= 8 MiB headroom for compiler-internal
    # scratch.  No 64 MiB clamp — v5e/v6e have 128 MiB and the need is tiny.
    w_bytes = 2 if use_bf16_mxu else 4
    weight_bytes = D * H * w_bytes + H * C * w_bytes + (H + C) * 4
    weight_bufs = 1 if _HAS_PIPELINE_MODE else 2
    vmem_needed = (
        2 * tb * D * 4            # x tiles (double-buffered)
        + 2 * tb * C * 4          # out tiles (double-buffered)
        + weight_bufs * weight_bytes
        + tb * D * 2              # bf16 copy of x tile
        + tb * H * (4 + 2)        # f32 h + bf16 copy of h
        + tb * C * 4              # f32 y before cast/store
    )
    vmem_limit = int(max(vmem_needed + (8 << 20), 32 << 20))

    kernel = partial(_encoder_kernel, mxu_dtype=mxu_dtype)

    out = pl.pallas_call(
        kernel,
        out_shape=jax.ShapeDtypeStruct((N, C), x.dtype),
        grid_spec=pltpu.PrefetchScalarGridSpec(
            num_scalar_prefetch=0,
            grid=(grid_steps,),
            in_specs=[
                pl.BlockSpec((tb, D), lambda i: (i, 0)),  # x tile (batch-sliced)
                _resident_spec((D, H)),                    # W1 (resident, bf16)
                _resident_spec((1, H)),                    # b1 (f32)
                _resident_spec((H, C)),                    # W2 (resident, bf16)
                _resident_spec((1, C)),                    # b2 (f32)
            ],
            out_specs=pl.BlockSpec((tb, C), lambda i: (i, 0)),
        ),
        compiler_params=pltpu.CompilerParams(
            dimension_semantics=("parallel",),
            vmem_limit_bytes=vmem_limit,
        ),
    )(x, w1m, b1f, w2m, b2f)

    return out


def init_params(key, in_dim, hidden_dim, n_components, dtype=jnp.float32):
    """Deterministic synthetic init (PyTorch-Linear-style uniform bounds)."""
    k1, k2, k3, k4 = jax.random.split(key, 4)
    bound1 = 1.0 / jnp.sqrt(in_dim)
    bound2 = 1.0 / jnp.sqrt(hidden_dim)
    w1 = jax.random.uniform(k1, (in_dim, hidden_dim), dtype, -bound1, bound1)
    b1 = jax.random.uniform(k2, (1, hidden_dim), dtype, -bound1, bound1)
    w2 = jax.random.uniform(k3, (hidden_dim, n_components), dtype, -bound2, bound2)
    b2 = jax.random.uniform(k4, (1, n_components), dtype, -bound2, bound2)
    return w1, b1, w2, b2


def _reference_forward(x, params, mxu_dtype=jnp.float32):
    w1, b1, w2, b2 = params
    h = jnp.maximum(
        jnp.dot(x.astype(mxu_dtype), w1.astype(mxu_dtype),
                preferred_element_type=jnp.float32) + b1.astype(jnp.float32), 0.0)
    return jnp.dot(h.astype(mxu_dtype), w2.astype(mxu_dtype),
                   preferred_element_type=jnp.float32) + b2.astype(jnp.float32)


if __name__ == "__main__":
    # Small shapes consistent with the module:
    #   batch=8, input features=32, hidden_dim=32, n_components=16.
    # NOTE: at these shapes the kernel is pure launch/per-step overhead — the
    # tiling choices target realistic NDR batches (hundreds+ of rows).
    batch, in_dim, hidden_dim, n_components = 8, 32, 32, 16

    key = jax.random.PRNGKey(0)
    kx, kp = jax.random.split(key)
    x = jax.random.normal(kx, (batch, in_dim), dtype=jnp.float32)
    params = init_params(kp, in_dim, hidden_dim, n_components)

    out = jax.block_until_ready(simclr_forward(x, params))
    assert out.shape == (batch, n_components)

    # Tight check vs a reference using the same bf16-operand / f32-accum numerics.
    ref_bf16 = _reference_forward(x, params, mxu_dtype=jnp.bfloat16)
    assert jnp.allclose(out, ref_bf16, atol=1e-3, rtol=1e-3), "mismatch vs bf16 reference"

    # Loose check vs the full-f32 reference (bf16 MXU operands lose ~3 digits).
    ref_f32 = _reference_forward(x, params)
    assert jnp.allclose(out, ref_f32, atol=5e-2, rtol=5e-2), "mismatch vs f32 reference"

    # Larger batch: multi-step "parallel" grid (>=2 steps for v7x megacore),
    # unpadded narrow D/C, and a ragged last batch tile (N not a multiple of
    # tb) exercised via the cdiv grid.
    batch2, in2, hid2, comp2 = 1000, 96, 160, 48
    kx2, kp2 = jax.random.split(jax.random.PRNGKey(1))
    x2 = jax.random.normal(kx2, (batch2, in2), dtype=jnp.float32)
    params2 = init_params(kp2, in2, hid2, comp2)
    out2 = jax.block_until_ready(simclr_forward(x2, params2))
    assert out2.shape == (batch2, comp2)
    ref2 = _reference_forward(x2, params2, mxu_dtype=jnp.bfloat16)
    assert jnp.allclose(out2, ref2, atol=3e-3, rtol=3e-3), "mismatch vs bf16 reference (big)"

    print("KERNEL_OK")
</pallas_src>

<mosaic_0001>
module attributes {stable_mosaic.version = 11 : i64} {
  func.func @_encoder_kernel(%arg0: i32, %arg1: memref<8x32xf32, #tpu.memory_space<vmem>>, %arg2: memref<32x32xbf16, #tpu.memory_space<vmem>>, %arg3: memref<1x32xf32, #tpu.memory_space<vmem>>, %arg4: memref<32x16xbf16, #tpu.memory_space<vmem>>, %arg5: memref<1x16xf32, #tpu.memory_space<vmem>>, %arg6: memref<8x16xf32, #tpu.memory_space<vmem>>) attributes {dimension_semantics = [#tpu.dimension_semantics<parallel>], iteration_bounds = array<i64: 1>, scalar_prefetch = 0 : i64, scratch_operands = 0 : i64, tpu.core_type = #tpu.core_type<tc>, window_params = [{transform_indices = @transform_0, window_bounds = array<i64: 8, 32>}, {pipeline_mode = #tpu.pipeline_mode<synchronous>, transform_indices = @transform_1, window_bounds = array<i64: 32, 32>}, {pipeline_mode = #tpu.pipeline_mode<synchronous>, transform_indices = @transform_2, window_bounds = array<i64: 1, 32>}, {pipeline_mode = #tpu.pipeline_mode<synchronous>, transform_indices = @transform_3, window_bounds = array<i64: 32, 16>}, {pipeline_mode = #tpu.pipeline_mode<synchronous>, transform_indices = @transform_4, window_bounds = array<i64: 1, 16>}, {transform_indices = @transform_5, window_bounds = array<i64: 8, 16>}]} {
    %c0 = arith.constant 0 : index
    %c0_0 = arith.constant 0 : index
    %0 = vector.load %arg1[%c0, %c0_0] : memref<8x32xf32, #tpu.memory_space<vmem>>, vector<8x32xf32>
    %1 = arith.truncf %0 : vector<8x32xf32> to vector<8x32xbf16>
    %c0_1 = arith.constant 0 : index
    %c0_2 = arith.constant 0 : index
    %2 = vector.load %arg2[%c0_1, %c0_2] : memref<32x32xbf16, #tpu.memory_space<vmem>>, vector<32x32xbf16>
    %cst = arith.constant dense<0.000000e+00> : vector<8x32xf32>
    %3 = tpu.matmul %1, %2, %cst {dimension_numbers = #tpu.dot_dimension_numbers<[1], [0], [0], [1], [0, 0, 1, 1], [], []>} : vector<8x32xbf16>, vector<32x32xbf16>, vector<8x32xf32> -> vector<8x32xf32>
    %c0_3 = arith.constant 0 : index
    %c0_4 = arith.constant 0 : index
    %4 = vector.load %arg3[%c0_3, %c0_4] : memref<1x32xf32, #tpu.memory_space<vmem>>, vector<1x32xf32>
    %5 = vector.broadcast %4 : vector<1x32xf32> to vector<8x32xf32>
    %6 = arith.addf %3, %5 : vector<8x32xf32>
    %cst_5 = arith.constant 0.000000e+00 : f32
    %7 = vector.broadcast %cst_5 : f32 to vector<8x32xf32>
    %8 = arith.maximumf %6, %7 : vector<8x32xf32>
    %9 = arith.truncf %8 : vector<8x32xf32> to vector<8x32xbf16>
    %c0_6 = arith.constant 0 : index
    %c0_7 = arith.constant 0 : index
    %10 = vector.load %arg4[%c0_6, %c0_7] : memref<32x16xbf16, #tpu.memory_space<vmem>>, vector<32x16xbf16>
    %cst_8 = arith.constant dense<0.000000e+00> : vector<8x16xf32>
    %11 = tpu.matmul %9, %10, %cst_8 {dimension_numbers = #tpu.dot_dimension_numbers<[1], [0], [0], [1], [0, 0, 1, 1], [], []>} : vector<8x32xbf16>, vector<32x16xbf16>, vector<8x16xf32> -> vector<8x16xf32>
    %c0_9 = arith.constant 0 : index
    %c0_10 = arith.constant 0 : index
    %12 = vector.load %arg5[%c0_9, %c0_10] : memref<1x16xf32, #tpu.memory_space<vmem>>, vector<1x16xf32>
    %13 = vector.broadcast %12 : vector<1x16xf32> to vector<8x16xf32>
    %14 = arith.addf %11, %13 : vector<8x16xf32>
    %c0_11 = arith.constant 0 : index
    %c0_12 = arith.constant 0 : index
    %15 = vector.load %arg6[%c0_11, %c0_12] : memref<8x16xf32, #tpu.memory_space<vmem>>, vector<8x16xf32>
    tpu.vector_store %arg6[%c0_11, %c0_12], %14 {strides = array<i32>} : memref<8x16xf32, #tpu.memory_space<vmem>>, vector<8x16xf32>,
    return
  }
  func.func @transform_0(%arg0: i32) -> (i32, i32) {
    %c0_i32 = arith.constant 0 : i32
    %c0_i32_0 = arith.constant 0 : i32
    return %arg0, %c0_i32 : i32, i32
  }
  func.func @transform_1(%arg0: i32) -> (i32, i32) {
    %c0_i32 = arith.constant 0 : i32
    %c0_i32_0 = arith.constant 0 : i32
    %c0_i32_1 = arith.constant 0 : i32
    return %c0_i32, %c0_i32_0 : i32, i32
  }
  func.func @transform_2(%arg0: i32) -> (i32, i32) {
    %c0_i32 = arith.constant 0 : i32
    %c0_i32_0 = arith.constant 0 : i32
    %c0_i32_1 = arith.constant 0 : i32
    return %c0_i32, %c0_i32_0 : i32, i32
  }
  func.func @transform_3(%arg0: i32) -> (i32, i32) {
    %c0_i32 = arith.constant 0 : i32
    %c0_i32_0 = arith.constant 0 : i32
    %c0_i32_1 = arith.constant 0 : i32
    return %c0_i32, %c0_i32_0 : i32, i32
  }
  func.func @transform_4(%arg0: i32) -> (i32, i32) {
    %c0_i32 = arith.constant 0 : i32
    %c0_i32_0 = arith.constant 0 : i32
    %c0_i32_1 = arith.constant 0 : i32
    return %c0_i32, %c0_i32_0 : i32, i32
  }
  func.func @transform_5(%arg0: i32) -> (i32, i32) {
    %c0_i32 = arith.constant 0 : i32
    %c0_i32_0 = arith.constant 0 : i32
    return %arg0, %c0_i32 : i32, i32
  }
}

</mosaic_0001>

<llo_original>
// kernel: tpu_custom_call.1
$region0: #{tpu_custom_call.1}
  #allocation0 [shape = 'u32[]', space=smem, size = 0x4, offset = 0x4, fixed_abs, tag = 'smem constant byte address 0x4 - core index']
  #allocation1 [shape = 'u32[72,128]{1,0:T(1,128)}', space=vmem, size = 0x9000, scoped, tag = 'internal scratch']
  %s0 = inlined_call_operand.vmem [shape: f32[8,32], index: 0, kind: input, shape index: {}]
  %s1 = inlined_call_operand.vmem [shape: bf16[32,32], index: 1, kind: input, shape index: {}]
  %s2 = inlined_call_operand.vmem [shape: f32[1,32], index: 2, kind: input, shape index: {}]
  %s3 = inlined_call_operand.vmem [shape: bf16[32,16], index: 3, kind: input, shape index: {}]
  %s4 = inlined_call_operand.vmem [shape: f32[1,16], index: 4, kind: input, shape index: {}]
  %s5 = inlined_call_operand.hbm [shape: f32[8,16], index: 5, kind: output, shape index: {}]
  %s6 = sld [smem:[#allocation0]]
  $region30: #{tpu_custom_call.1} parent=0
    _
  %s8 = ssub.s32 1, %s6
  %s9 = scalar_select 0, %s8, %s6
  $region1: #{tpu_custom_call.1} parent=0
    #allocation2 [shape = 'u8[4096]{0}', space=vmem, size = 0x1000, scoped, tag = 'output window, operand 0, single buffered']
    #allocation3 [shape = 's32[1]{0}', space=sflag, size = 0x4, scoped, tag = 'scoped memory for tpu_custom_call.1']
    %10 = vsyncpa [#allocation3], 0
    // Predicated region
    $region2: #{tpu_custom_call.1} parent=1 // pred_check
      _
    $region3: #{tpu_custom_call.1} parent=1 // pred_check_branch
      %12 = sbr.rel (0) target = $region5
    $region4: #{tpu_custom_call.1} parent=1 // pred_region
      _
    $region5: #{tpu_custom_call.1} parent=1 // pred_fallthru
      _
    // Predicated region
    $region6: #{tpu_custom_call.1} parent=1 // pred_check
      _
    $region7: #{tpu_custom_call.1} parent=1 // pred_check_branch
      %14 = sbr.rel (0) target = $region9
    $region8: #{tpu_custom_call.1} parent=1 // pred_region
      _
    $region9: #{tpu_custom_call.1} parent=1 // pred_fallthru
      _
    // Predicated region
    $region10: #{tpu_custom_call.1} parent=1 // pred_check
      _
    $region11: #{tpu_custom_call.1} parent=1 // pred_check_branch
      %16 = sbr.rel (0) target = $region13
    $region12: #{tpu_custom_call.1} parent=1 // pred_region
      _
    $region13: #{tpu_custom_call.1} parent=1 // pred_fallthru
      _
    // Predicated region
    $region14: #{tpu_custom_call.1} parent=1 // pred_check
      _
    $region15: #{tpu_custom_call.1} parent=1 // pred_check_branch
      %18 = sbr.rel (0) target = $region17
    $region16: #{tpu_custom_call.1} parent=1 // pred_region
      _
    $region17: #{tpu_custom_call.1} parent=1 // pred_fallthru
      _
    // Predicated region
    $region18: #{tpu_custom_call.1} parent=1 // pred_check
      _
    $region19: #{tpu_custom_call.1} parent=1 // pred_check_branch
      %20 = sbr.rel (0) target = $region21
    $region20: #{tpu_custom_call.1} parent=1 // pred_region
      _
    $region21: #{tpu_custom_call.1} parent=1 // pred_fallthru
      _
    %v22 = vld [vmem:[%s0] sm:$0xff]
    %v23 = vpack.c.bf16 %v22, %v22
    %v24 = vld [vmem:[%s1] sm:$0xf]
    %v25 = vld [vmem:[%s1 + $0x4] sm:$0xf]
    %v26 = vld [vmem:[%s1 + $0x8] sm:$0xf]
    %v27 = vld [vmem:[%s1 + $0xc] sm:$0xf]
    %v28 = vld [vmem:[%s2] sm:$0x1]
    %v30 = vperm.slane %v28, 0
    %v36 = vunpack.c.l.b16 %v24
    %v37 = vunpack.c.l.b16 %v25
    %v38 = vunpack.c.l.b16 %v26
    %v39 = vunpack.c.l.b16 %v27
    %v40 = vpack.c.b16 %v37, %v36
    %v41 = vpack.c.b16 %v39, %v38
    %vm44 = vcmask 261120
    %v46 = vsel %vm44, %v23, 0
    %48 = vmatpush.bf16.msra.mxu0 0
    %49 = vmatpush.bf16.msra.mxu0 0
    %50 = vmatpush.bf16.msra.mxu0 0
    %51 = vmatpush.bf16.msra.mxu0 0
    %52 = vmatpush.bf16.msra.mxu0 0
    %53 = vmatpush.bf16.msra.mxu0 0
    %54 = vmatpush.bf16.msra.mxu0 %v41
    %55 = vmatpush.bf16.msra.mxu0 %v40
    %56 = vmatmul.bf16.gmra.mxu0 %v46
    %v57 = vpop.f32.mrf.mxu0
    %v58 = vadd.f32 %v30, %v57
    %v59 = vpop.f32.mrf.mxu0
    %60 = vdwg.mxu0
    %v61 = vmax.f32 %v58, 0.0
    %v62 = vpack.c.bf16 %v61, %v61
    %v63 = vld [vmem:[%s3] sm:$0xf]
    %v64 = vld [vmem:[%s3 + $0x4] sm:$0xf]
    %v65 = vld [vmem:[%s3 + $0x8] sm:$0xf]
    %v66 = vld [vmem:[%s3 + $0xc] sm:$0xf]
    %v67 = vld [vmem:[%s4] sm:$0x1]
    %v69 = vperm.slane %v67, 0
    %v75 = vunpack.c.l.b16 %v63
    %v76 = vunpack.c.l.b16 %v64
    %v77 = vunpack.c.l.b16 %v65
    %v78 = vunpack.c.l.b16 %v66
    %v79 = vpack.c.b16 %v76, %v75
    %v80 = vpack.c.b16 %v78, %v77
    %v84 = vsel %vm44, %v62, 0
    %86 = vmatpush.bf16.msra.mxu0 0
    %87 = vmatpush.bf16.msra.mxu0 0
    %88 = vmatpush.bf16.msra.mxu0 0
    %89 = vmatpush.bf16.msra.mxu0 0
    %90 = vmatpush.bf16.msra.mxu0 0
    %91 = vmatpush.bf16.msra.mxu0 0
    %92 = vmatpush.bf16.msra.mxu0 %v80
    %93 = vmatpush.bf16.msra.mxu0 %v79
    %94 = vmatmul.bf16.gmra.mxu0 %v84
    %v95 = vpop.f32.mrf.mxu0
    %v96 = vadd.f32 %v69, %v95
    %v97 = vpop.f32.mrf.mxu0
    %98 = vdwg.mxu0
    %vm99 = vcmask 130048
    %100 = vst.msk [vmem:[#allocation2] sm:$0xff] %vm99, %v96
    // Predicated region
    $region22: #{tpu_custom_call.1} parent=1 // pred_check
      _
    $region23: #{tpu_custom_call.1} parent=1 // pred_check_branch
      %102 = sbr.rel (0) target = $region25
    $region24: #{tpu_custom_call.1} parent=1 // pred_region
      %104 = vsyncadd [#allocation3], 0
      %s106 = sshll.u32 [#allocation2], 4
      %s107 = int_to_ptr.vmem [resolvable:$true] %s106
      %s108 = sshll.u32 %s5, 4
      %s109 = int_to_ptr.hbm [resolvable:$true] %s108
      %111 = dma.vmem_to_hbm [thread:$0]  %s107, 128, %s109, [#allocation3]
    $region25: #{tpu_custom_call.1} parent=1 // pred_fallthru
      _
    // Predicated region
    $region26: #{tpu_custom_call.1} parent=1 // pred_check
      _
    $region27: #{tpu_custom_call.1} parent=1 // pred_check_branch
      %113 = sbr.rel (0) target = $region29
    $region28: #{tpu_custom_call.1} parent=1 // pred_region
      %115 = dma.done [#allocation3], 128
    $region29: #{tpu_custom_call.1} parent=1 // pred_fallthru
      _
    %116 = vsyncpa [#allocation3], 1

</llo_original>
